<compile_context>
chip_gen: v7x
topology: tpu7x:2x2x1
jax: 0.10.0
libtpu: 0.0.40
codegen_flags: <defaults>
</compile_context>

<pallas_src>
import jax
import jax.numpy as jnp
from jax.experimental import pallas as pl
from jax.experimental.pallas import tpu as pltpu


def _round_up(x, m):
    return ((x + m - 1) // m) * m


# ----------------------------- Pallas kernel --------------------------------
def recon_lut_kernel(lut_ref, ids_ref, out_ref):
    # lut_ref : (VOCAB,) f32  in SMEM  -- per-token-id network output (b2 baked in)
    # ids_ref : (TR, C)  int32         -- dense 2-D tile of token ids (lane-dense)
    # out_ref : (TR, C)  f32           -- dense 2-D tile of outputs
    ids = ids_ref[...]
    vocab = lut_ref.shape[0]
    acc = jnp.zeros(ids.shape, jnp.float32)
    # Static unroll over the tiny vocab: 16 VPU compare/selects per vreg.
    # Ids outside [0, vocab) fall through to 0.0 (documented deviation from
    # jnp.take's clamp semantics).
    for v in range(vocab):
        acc = jnp.where(ids == v, lut_ref[v], acc)
    out_ref[...] = acc


# ----------------------------- Wrapper ---------------------------------------
def reconstructor_forward(params, x, lane=512, rows_per_tile=64):
    # x: (N,) integer token ids  ->  (N,) f32   (== fcn(embedder(x)).flatten())
    n = x.shape[0]
    vocab, _ = params["emb_table"].shape

    # ---- parameter-only precompute (exact LUT collapse of the network) ----
    tab = params["emb_table"].astype(jnp.float32)                       # (V, E)
    hid = jnp.maximum(
        tab @ params["w1"].T.astype(jnp.float32)
        + params["b1"].astype(jnp.float32), 0.0)                        # (V, H)
    lut = (hid @ params["w2"].T.astype(jnp.float32)
           + params["b2"].astype(jnp.float32)).reshape(-1)              # (V,)

    # ---- dense 2-D tiling of the token stream ----
    c = min(lane, _round_up(max(n, 1), 128))        # lane width, multiple of 128
    rows = -(-n // c)                               # ceil-div
    tr = rows_per_tile if rows >= rows_per_tile else rows   # sublane rows / tile
    rows_pad = _round_up(rows, tr)
    n_pad = rows_pad * c
    num_tiles = rows_pad // tr

    ids = jnp.pad(x.astype(jnp.int32), (0, n_pad - n)).reshape(rows_pad, c)

    out = pl.pallas_call(
        recon_lut_kernel,
        out_shape=jax.ShapeDtypeStruct((rows_pad, c), jnp.float32),
        grid=(num_tiles,),
        in_specs=[
            pl.BlockSpec(memory_space=pltpu.MemorySpace.SMEM),   # lut (resident)
            pl.BlockSpec((tr, c), lambda i: (i, 0)),             # ids (streamed)
        ],
        out_specs=pl.BlockSpec((tr, c), lambda i: (i, 0)),
        compiler_params=pltpu.CompilerParams(
            dimension_semantics=("parallel",)),
        cost_estimate=pl.CostEstimate(
            flops=2 * vocab * n_pad,                 # cmp+select per vocab entry
            transcendentals=0,
            bytes_accessed=n_pad * 4 + n_pad * 4 + vocab * 4),
    )(lut, ids)

    return out.reshape(-1)[:n]                        # .flatten(), trim padding


# ----------------------------- Params / reference ----------------------------
def init_params(key, vocab_size=16, emb_size=32, hidden_size=64):
    k_emb, k_w1, k_b1, k_w2, k_b2 = jax.random.split(key, 5)
    return {
        "emb_table": jax.random.normal(k_emb, (vocab_size, emb_size), jnp.float32) * 0.1,
        # PyTorch nn.Linear layout: weight is (out_features, in_features)
        "w1": jax.random.normal(k_w1, (hidden_size, emb_size), jnp.float32) * 0.1,
        "b1": jax.random.normal(k_b1, (hidden_size,), jnp.float32) * 0.01,
        "w2": jax.random.normal(k_w2, (1, hidden_size), jnp.float32) * 0.1,
        "b2": jax.random.normal(k_b2, (1,), jnp.float32) * 0.01,
    }


def reference_forward(params, x):
    emb = jnp.take(params["emb_table"], x, axis=0)                      # embedder
    hdn = jnp.maximum(emb @ params["w1"].T + params["b1"], 0.0)         # Linear+ReLU
    return (hdn @ params["w2"].T + params["b2"]).reshape(-1)            # Linear+flatten


# ----------------------------------- Main ------------------------------------
if __name__ == "__main__":
    key = jax.random.PRNGKey(0)
    k_params, k_x1, k_x2 = jax.random.split(key, 3)

    N = 8            # sequence / batch of tokens
    VOCAB = 16
    EMB = 32         # embedder hidden size
    HIDDEN = 64      # fcn hidden size (module default)

    params = init_params(k_params, vocab_size=VOCAB, emb_size=EMB, hidden_size=HIDDEN)

    # Small case (single tile).
    x1 = jax.random.randint(k_x1, (N,), 0, VOCAB, dtype=jnp.int32)
    out1 = jax.block_until_ready(reconstructor_forward(params, x1))
    ref1 = reference_forward(params, x1)
    assert out1.shape == (N,)
    assert jnp.allclose(out1, ref1, atol=1e-4, rtol=1e-4), "mismatch vs reference (small)"

    # Larger case exercising the multi-tile parallel grid path.
    N2 = 5000
    x2 = jax.random.randint(k_x2, (N2,), 0, VOCAB, dtype=jnp.int32)
    out2 = jax.block_until_ready(
        reconstructor_forward(params, x2, lane=128, rows_per_tile=8))
    ref2 = reference_forward(params, x2)
    assert out2.shape == (N2,)
    assert jnp.allclose(out2, ref2, atol=1e-4, rtol=1e-4), "mismatch vs reference (tiled)"

    print("KERNEL_OK")
</pallas_src>

<mosaic_0001>
module attributes {stable_mosaic.version = 11 : i64} {
  func.func @recon_lut_kernel(%arg0: i32, %arg1: memref<16xf32, #tpu.memory_space<smem>>, %arg2: memref<1x128xi32, #tpu.memory_space<vmem>>, %arg3: memref<1x128xf32, #tpu.memory_space<vmem>>) attributes {dimension_semantics = [#tpu.dimension_semantics<parallel>], iteration_bounds = array<i64: 1>, scalar_prefetch = 0 : i64, scratch_operands = 0 : i64, tpu.core_type = #tpu.core_type<tc>, window_params = [{transform_indices = @transform_0, window_bounds = array<i64: 16>}, {transform_indices = @transform_1, window_bounds = array<i64: 1, 128>}, {transform_indices = @transform_2, window_bounds = array<i64: 1, 128>}]} {
    %c0 = arith.constant 0 : index
    %c0_0 = arith.constant 0 : index
    %0 = vector.load %arg2[%c0, %c0_0] : memref<1x128xi32, #tpu.memory_space<vmem>>, vector<1x128xi32>
    %cst = arith.constant 0.000000e+00 : f32
    %1 = vector.broadcast %cst : f32 to vector<1x128xf32>
    %c0_i32 = arith.constant 0 : i32
    %2 = vector.broadcast %c0_i32 : i32 to vector<1x128xi32>
    %3 = arith.cmpi eq, %0, %2 : vector<1x128xi32>
    %c0_1 = arith.constant 0 : index
    %4 = memref.load %arg1[%c0_1] : memref<16xf32, #tpu.memory_space<smem>>
    %5 = vector.broadcast %4 : f32 to vector<1x128xf32>
    %6 = arith.select %3, %5, %1 : vector<1x128xi1>, vector<1x128xf32>
    %c1_i32 = arith.constant 1 : i32
    %7 = vector.broadcast %c1_i32 : i32 to vector<1x128xi32>
    %8 = arith.cmpi eq, %0, %7 : vector<1x128xi32>
    %c1 = arith.constant 1 : index
    %9 = memref.load %arg1[%c1] : memref<16xf32, #tpu.memory_space<smem>>
    %10 = vector.broadcast %9 : f32 to vector<1x128xf32>
    %11 = arith.select %8, %10, %6 : vector<1x128xi1>, vector<1x128xf32>
    %c2_i32 = arith.constant 2 : i32
    %12 = vector.broadcast %c2_i32 : i32 to vector<1x128xi32>
    %13 = arith.cmpi eq, %0, %12 : vector<1x128xi32>
    %c2 = arith.constant 2 : index
    %14 = memref.load %arg1[%c2] : memref<16xf32, #tpu.memory_space<smem>>
    %15 = vector.broadcast %14 : f32 to vector<1x128xf32>
    %16 = arith.select %13, %15, %11 : vector<1x128xi1>, vector<1x128xf32>
    %c3_i32 = arith.constant 3 : i32
    %17 = vector.broadcast %c3_i32 : i32 to vector<1x128xi32>
    %18 = arith.cmpi eq, %0, %17 : vector<1x128xi32>
    %c3 = arith.constant 3 : index
    %19 = memref.load %arg1[%c3] : memref<16xf32, #tpu.memory_space<smem>>
    %20 = vector.broadcast %19 : f32 to vector<1x128xf32>
    %21 = arith.select %18, %20, %16 : vector<1x128xi1>, vector<1x128xf32>
    %c4_i32 = arith.constant 4 : i32
    %22 = vector.broadcast %c4_i32 : i32 to vector<1x128xi32>
    %23 = arith.cmpi eq, %0, %22 : vector<1x128xi32>
    %c4 = arith.constant 4 : index
    %24 = memref.load %arg1[%c4] : memref<16xf32, #tpu.memory_space<smem>>
    %25 = vector.broadcast %24 : f32 to vector<1x128xf32>
    %26 = arith.select %23, %25, %21 : vector<1x128xi1>, vector<1x128xf32>
    %c5_i32 = arith.constant 5 : i32
    %27 = vector.broadcast %c5_i32 : i32 to vector<1x128xi32>
    %28 = arith.cmpi eq, %0, %27 : vector<1x128xi32>
    %c5 = arith.constant 5 : index
    %29 = memref.load %arg1[%c5] : memref<16xf32, #tpu.memory_space<smem>>
    %30 = vector.broadcast %29 : f32 to vector<1x128xf32>
    %31 = arith.select %28, %30, %26 : vector<1x128xi1>, vector<1x128xf32>
    %c6_i32 = arith.constant 6 : i32
    %32 = vector.broadcast %c6_i32 : i32 to vector<1x128xi32>
    %33 = arith.cmpi eq, %0, %32 : vector<1x128xi32>
    %c6 = arith.constant 6 : index
    %34 = memref.load %arg1[%c6] : memref<16xf32, #tpu.memory_space<smem>>
    %35 = vector.broadcast %34 : f32 to vector<1x128xf32>
    %36 = arith.select %33, %35, %31 : vector<1x128xi1>, vector<1x128xf32>
    %c7_i32 = arith.constant 7 : i32
    %37 = vector.broadcast %c7_i32 : i32 to vector<1x128xi32>
    %38 = arith.cmpi eq, %0, %37 : vector<1x128xi32>
    %c7 = arith.constant 7 : index
    %39 = memref.load %arg1[%c7] : memref<16xf32, #tpu.memory_space<smem>>
    %40 = vector.broadcast %39 : f32 to vector<1x128xf32>
    %41 = arith.select %38, %40, %36 : vector<1x128xi1>, vector<1x128xf32>
    %c8_i32 = arith.constant 8 : i32
    %42 = vector.broadcast %c8_i32 : i32 to vector<1x128xi32>
    %43 = arith.cmpi eq, %0, %42 : vector<1x128xi32>
    %c8 = arith.constant 8 : index
    %44 = memref.load %arg1[%c8] : memref<16xf32, #tpu.memory_space<smem>>
    %45 = vector.broadcast %44 : f32 to vector<1x128xf32>
    %46 = arith.select %43, %45, %41 : vector<1x128xi1>, vector<1x128xf32>
    %c9_i32 = arith.constant 9 : i32
    %47 = vector.broadcast %c9_i32 : i32 to vector<1x128xi32>
    %48 = arith.cmpi eq, %0, %47 : vector<1x128xi32>
    %c9 = arith.constant 9 : index
    %49 = memref.load %arg1[%c9] : memref<16xf32, #tpu.memory_space<smem>>
    %50 = vector.broadcast %49 : f32 to vector<1x128xf32>
    %51 = arith.select %48, %50, %46 : vector<1x128xi1>, vector<1x128xf32>
    %c10_i32 = arith.constant 10 : i32
    %52 = vector.broadcast %c10_i32 : i32 to vector<1x128xi32>
    %53 = arith.cmpi eq, %0, %52 : vector<1x128xi32>
    %c10 = arith.constant 10 : index
    %54 = memref.load %arg1[%c10] : memref<16xf32, #tpu.memory_space<smem>>
    %55 = vector.broadcast %54 : f32 to vector<1x128xf32>
    %56 = arith.select %53, %55, %51 : vector<1x128xi1>, vector<1x128xf32>
    %c11_i32 = arith.constant 11 : i32
    %57 = vector.broadcast %c11_i32 : i32 to vector<1x128xi32>
    %58 = arith.cmpi eq, %0, %57 : vector<1x128xi32>
    %c11 = arith.constant 11 : index
    %59 = memref.load %arg1[%c11] : memref<16xf32, #tpu.memory_space<smem>>
    %60 = vector.broadcast %59 : f32 to vector<1x128xf32>
    %61 = arith.select %58, %60, %56 : vector<1x128xi1>, vector<1x128xf32>
    %c12_i32 = arith.constant 12 : i32
    %62 = vector.broadcast %c12_i32 : i32 to vector<1x128xi32>
    %63 = arith.cmpi eq, %0, %62 : vector<1x128xi32>
    %c12 = arith.constant 12 : index
    %64 = memref.load %arg1[%c12] : memref<16xf32, #tpu.memory_space<smem>>
    %65 = vector.broadcast %64 : f32 to vector<1x128xf32>
    %66 = arith.select %63, %65, %61 : vector<1x128xi1>, vector<1x128xf32>
    %c13_i32 = arith.constant 13 : i32
    %67 = vector.broadcast %c13_i32 : i32 to vector<1x128xi32>
    %68 = arith.cmpi eq, %0, %67 : vector<1x128xi32>
    %c13 = arith.constant 13 : index
    %69 = memref.load %arg1[%c13] : memref<16xf32, #tpu.memory_space<smem>>
    %70 = vector.broadcast %69 : f32 to vector<1x128xf32>
    %71 = arith.select %68, %70, %66 : vector<1x128xi1>, vector<1x128xf32>
    %c14_i32 = arith.constant 14 : i32
    %72 = vector.broadcast %c14_i32 : i32 to vector<1x128xi32>
    %73 = arith.cmpi eq, %0, %72 : vector<1x128xi32>
    %c14 = arith.constant 14 : index
    %74 = memref.load %arg1[%c14] : memref<16xf32, #tpu.memory_space<smem>>
    %75 = vector.broadcast %74 : f32 to vector<1x128xf32>
    %76 = arith.select %73, %75, %71 : vector<1x128xi1>, vector<1x128xf32>
    %c15_i32 = arith.constant 15 : i32
    %77 = vector.broadcast %c15_i32 : i32 to vector<1x128xi32>
    %78 = arith.cmpi eq, %0, %77 : vector<1x128xi32>
    %c15 = arith.constant 15 : index
    %79 = memref.load %arg1[%c15] : memref<16xf32, #tpu.memory_space<smem>>
    %80 = vector.broadcast %79 : f32 to vector<1x128xf32>
    %81 = arith.select %78, %80, %76 : vector<1x128xi1>, vector<1x128xf32>
    %c0_2 = arith.constant 0 : index
    %c0_3 = arith.constant 0 : index
    %82 = vector.load %arg3[%c0_2, %c0_3] : memref<1x128xf32, #tpu.memory_space<vmem>>, vector<1x128xf32>
    tpu.vector_store %arg3[%c0_2, %c0_3], %81 {strides = array<i32>} : memref<1x128xf32, #tpu.memory_space<vmem>>, vector<1x128xf32>,
    return
  }
  func.func @transform_0(%arg0: i32) -> i32 {
    %c0_i32 = arith.constant 0 : i32
    %c0_i32_0 = arith.constant 0 : i32
    return %c0_i32 : i32
  }
  func.func @transform_1(%arg0: i32) -> (i32, i32) {
    %c0_i32 = arith.constant 0 : i32
    %c0_i32_0 = arith.constant 0 : i32
    return %arg0, %c0_i32 : i32, i32
  }
  func.func @transform_2(%arg0: i32) -> (i32, i32) {
    %c0_i32 = arith.constant 0 : i32
    %c0_i32_0 = arith.constant 0 : i32
    return %arg0, %c0_i32 : i32, i32
  }
}

</mosaic_0001>

<llo_original>
// kernel: tpu_custom_call.1
$region0: #{tpu_custom_call.1}
  #allocation0 [shape = 'u32[]', space=smem, size = 0x4, offset = 0x4, fixed_abs, tag = 'smem constant byte address 0x4 - core index']
  #allocation1 [shape = 'u32[144,128]{1,0:T(1,128)}', space=vmem, size = 0x12000, scoped, tag = 'internal scratch']
  %s0 = inlined_call_operand.hbm [shape: f32[16], index: 0, kind: input, shape index: {}]
  %s1 = inlined_call_operand.vmem [shape: s32[1,128], index: 1, kind: input, shape index: {}]
  %s2 = inlined_call_operand.hbm [shape: f32[1,128], index: 2, kind: output, shape index: {}]
  %s3 = sld [smem:[#allocation0]]
  $region22: #{tpu_custom_call.1} parent=0
    _
  %s5 = ssub.s32 1, %s3
  %s6 = scalar_select 0, %s5, %s3
  $region1: #{tpu_custom_call.1} parent=0
    #allocation2 [shape = 'u8[512]{0}', space=smem, size = 0x200, scoped, tag = 'input window, operand 0, single buffered']
    #allocation3 [shape = 's32[1]{0}', space=sflag, size = 0x4, scoped, tag = 'scoped memory for tpu_custom_call.1']
    #allocation4 [shape = 's32[1]{0}', space=sflag, size = 0x4, scoped, tag = 'scoped memory for tpu_custom_call.1']
    #allocation5 [shape = 'u8[512]{0}', space=vmem, size = 0x400, scoped, tag = 'output window, operand 0, single buffered']
    %7 = vsyncpa [#allocation4], 0
    %8 = vsyncpa [#allocation3], 0
    // Predicated region
    $region2: #{tpu_custom_call.1} parent=1 // pred_check
      _
    $region3: #{tpu_custom_call.1} parent=1 // pred_check_branch
      %10 = sbr.rel (0) target = $region5
    $region4: #{tpu_custom_call.1} parent=1 // pred_region
      %s12 = ssub.s32 16, 16
      %13 = vsyncadd [#allocation4], %s12
      %16 = dma.hbm_to_smem %s0, 16, [#allocation2], [#allocation4]
    $region5: #{tpu_custom_call.1} parent=1 // pred_fallthru
      _
    // Predicated region
    $region6: #{tpu_custom_call.1} parent=1 // pred_check
      _
    $region7: #{tpu_custom_call.1} parent=1 // pred_check_branch
      %18 = sbr.rel (0) target = $region9
    $region8: #{tpu_custom_call.1} parent=1 // pred_region
      _
    $region9: #{tpu_custom_call.1} parent=1 // pred_fallthru
      _
    // Predicated region
    $region10: #{tpu_custom_call.1} parent=1 // pred_check
      _
    $region11: #{tpu_custom_call.1} parent=1 // pred_check_branch
      %20 = sbr.rel (0) target = $region13
    $region12: #{tpu_custom_call.1} parent=1 // pred_region
      %21 = dma.done [#allocation4], 16
    $region13: #{tpu_custom_call.1} parent=1 // pred_fallthru
      _
    %22 = sfence
    %v23 = vld [vmem:[%s1] sm:$0x1]
    %vm24 = vcmp.eq.s32.totalorder %v23, 0
    %s25 = sld [smem:[#allocation2]]
    %v26 = vstv %s25
    %v27 = vsel %vm24, %v26, 0.0
    %vm28 = vcmp.eq.s32.totalorder %v23, 1
    %s29 = sld [smem:[#allocation2 + $0x1]]
    %v30 = vstv %s29
    %v31 = vsel %vm28, %v30, %v27
    %vm32 = vcmp.eq.s32.totalorder %v23, 2
    %s33 = sld [smem:[#allocation2 + $0x2]]
    %v34 = vstv %s33
    %v35 = vsel %vm32, %v34, %v31
    %vm36 = vcmp.eq.s32.totalorder %v23, 3
    %s37 = sld [smem:[#allocation2 + $0x3]]
    %v38 = vstv %s37
    %v39 = vsel %vm36, %v38, %v35
    %vm40 = vcmp.eq.s32.totalorder %v23, 4
    %s41 = sld [smem:[#allocation2 + $0x4]]
    %v42 = vstv %s41
    %v43 = vsel %vm40, %v42, %v39
    %vm44 = vcmp.eq.s32.totalorder %v23, 5
    %s45 = sld [smem:[#allocation2 + $0x5]]
    %v46 = vstv %s45
    %v47 = vsel %vm44, %v46, %v43
    %vm48 = vcmp.eq.s32.totalorder %v23, 6
    %s49 = sld [smem:[#allocation2 + $0x6]]
    %v50 = vstv %s49
    %v51 = vsel %vm48, %v50, %v47
    %vm52 = vcmp.eq.s32.totalorder %v23, 7
    %s53 = sld [smem:[#allocation2 + $0x7]]
    %v54 = vstv %s53
    %v55 = vsel %vm52, %v54, %v51
    %vm56 = vcmp.eq.s32.totalorder %v23, 8
    %s57 = sld [smem:[#allocation2 + $0x8]]
    %v58 = vstv %s57
    %v59 = vsel %vm56, %v58, %v55
    %vm60 = vcmp.eq.s32.totalorder %v23, 9
    %s61 = sld [smem:[#allocation2 + $0x9]]
    %v62 = vstv %s61
    %v63 = vsel %vm60, %v62, %v59
    %vm64 = vcmp.eq.s32.totalorder %v23, 10
    %s65 = sld [smem:[#allocation2 + $0xa]]
    %v66 = vstv %s65
    %v67 = vsel %vm64, %v66, %v63
    %vm68 = vcmp.eq.s32.totalorder %v23, 11
    %s69 = sld [smem:[#allocation2 + $0xb]]
    %v70 = vstv %s69
    %v71 = vsel %vm68, %v70, %v67
    %vm72 = vcmp.eq.s32.totalorder %v23, 12
    %s73 = sld [smem:[#allocation2 + $0xc]]
    %v74 = vstv %s73
    %v75 = vsel %vm72, %v74, %v71
    %vm76 = vcmp.eq.s32.totalorder %v23, 13
    %s77 = sld [smem:[#allocation2 + $0xd]]
    %v78 = vstv %s77
    %v79 = vsel %vm76, %v78, %v75
    %vm80 = vcmp.eq.s32.totalorder %v23, 14
    %s81 = sld [smem:[#allocation2 + $0xe]]
    %v82 = vstv %s81
    %v83 = vsel %vm80, %v82, %v79
    %vm84 = vcmp.eq.s32.totalorder %v23, 15
    %s85 = sld [smem:[#allocation2 + $0xf]]
    %v86 = vstv %s85
    %v87 = vsel %vm84, %v86, %v83
    %88 = vst [vmem:[#allocation5] sm:$0x1] %v87
    // Predicated region
    $region14: #{tpu_custom_call.1} parent=1 // pred_check
      _
    $region15: #{tpu_custom_call.1} parent=1 // pred_check_branch
      %90 = sbr.rel (0) target = $region17
    $region16: #{tpu_custom_call.1} parent=1 // pred_region
      %s92 = ssub.s32 16, 16
      %93 = vsyncadd [#allocation3], %s92
      %s95 = sshll.u32 [#allocation5], 4
      %s96 = int_to_ptr.vmem [resolvable:$true] %s95
      %98 = dma.vmem_to_hbm [thread:$0]  %s96, 16, %s2, [#allocation3]
    $region17: #{tpu_custom_call.1} parent=1 // pred_fallthru
      _
    // Predicated region
    $region18: #{tpu_custom_call.1} parent=1 // pred_check
      _
    $region19: #{tpu_custom_call.1} parent=1 // pred_check_branch
      %100 = sbr.rel (0) target = $region21
    $region20: #{tpu_custom_call.1} parent=1 // pred_region
      %101 = dma.done [#allocation3], 16
    $region21: #{tpu_custom_call.1} parent=1 // pred_fallthru
      _
    %102 = vsyncpa [#allocation3], 1
    %103 = vsyncpa [#allocation4], 1

</llo_original>
